<compile_context>
chip_gen: v7x
topology: tpu7x:2x2x1
jax: 0.10.0
libtpu: 0.0.40
codegen_flags: <defaults>
</compile_context>

<pallas_src>
import functools

import jax
import jax.numpy as jnp
from jax.experimental import pallas as pl
from jax.experimental.pallas import tpu as pltpu


def _round_up(x: int, m: int) -> int:
    return (x + m - 1) // m * m


def _flatten_linear_kernel(a_ref, w_ref, b_ref, o_ref):
    """o = a @ w + bias for one M-block; weight/bias are VMEM-resident."""
    acc = jnp.dot(a_ref[...], w_ref[...], preferred_element_type=jnp.float32)
    o_ref[...] = (acc + b_ref[...].astype(jnp.float32)).astype(o_ref.dtype)


@functools.partial(jax.jit, static_argnames=("tm_max", "compute_dtype"))
def flatten_linear_vector(
    v: jax.Array,
    w_t: jax.Array,   # (3*d_v, d_f) == PyTorch weight transposed
    bias: jax.Array,  # (d_f,)
    *,
    tm_max: int = 512,
    compute_dtype=None,   # e.g. jnp.bfloat16 for v6e/v7x speed (loosens accuracy)
) -> jax.Array:
    """Pallas equivalent of FlattenLinearVector.forward(v)."""
    B = v.shape[0]
    v_flat = v.reshape(B, -1)              # (B, K)
    K = v_flat.shape[1]
    Kw, N = w_t.shape
    assert Kw == K, "weight in-features must equal prod(v.shape[1:])"

    if compute_dtype is not None:
        v_flat = v_flat.astype(compute_dtype)
        w_t = w_t.astype(compute_dtype)
    bias2d = bias.reshape(1, N)

    # M tile: single block for tiny B (full-dim exemption allows non-multiples
    # of 8), otherwise a multiple of 8 sized so the grid has >= 2 blocks
    # (keeps both v7x TensorCores busy) and is capped at tm_max.
    if B <= 16:
        tm = B
    else:
        tm = min(tm_max, _round_up(pl.cdiv(B, 2), 8))
    grid = (pl.cdiv(B, tm),)

    # Conservative VMEM budget: double-buffered A/output tiles + resident W/bias.
    in_isz = jnp.dtype(v_flat.dtype).itemsize
    vmem_needed = (
        2 * tm * K * in_isz                       # A tiles (double-buffered)
        + 2 * tm * N * jnp.dtype(v.dtype).itemsize  # output tiles
        + 2 * K * N * jnp.dtype(w_t.dtype).itemsize
        + 2 * N * jnp.dtype(bias.dtype).itemsize
        + tm * N * 4                              # f32 matmul result
    )
    vmem_limit = int(min(max(2 * vmem_needed, 16 * 1024 * 1024), 48 * 1024 * 1024))

    return pl.pallas_call(
        _flatten_linear_kernel,
        out_shape=jax.ShapeDtypeStruct((B, N), v.dtype),
        grid=grid,
        in_specs=[
            pl.BlockSpec((tm, K), lambda i: (i, 0)),   # activation stream
            pl.BlockSpec((K, N), lambda i: (0, 0)),    # resident weight
            pl.BlockSpec((1, N), lambda i: (0, 0)),    # resident bias
        ],
        out_specs=pl.BlockSpec((tm, N), lambda i: (i, 0)),
        compiler_params=pltpu.CompilerParams(
            dimension_semantics=("parallel",),
            vmem_limit_bytes=vmem_limit,
        ),
    )(v_flat, w_t, bias2d)


class FlattenLinearVectorPallas:
    """Mirror of the PyTorch module. Weight stored as (3*d_v, d_f) == W.T."""

    def __init__(self, d_v: int, d_f: int, key: jax.Array, dtype=jnp.float32):
        self.emb_dim = d_f
        k_in = 3 * d_v
        kw, kb = jax.random.split(key)
        bound = 1.0 / (k_in ** 0.5)  # matches nn.Linear default init range
        self.w = jax.random.uniform(kw, (k_in, d_f), dtype, -bound, bound)
        self.b = jax.random.uniform(kb, (d_f,), dtype, -bound, bound)

    def __call__(self, v: jax.Array) -> jax.Array:
        return flatten_linear_vector(v, self.w, self.b)


if __name__ == "__main__":
    d_v, d_f = 32, 16

    key = jax.random.PRNGKey(0)
    k_v, k_v2, k_params = jax.random.split(key, 3)
    module = FlattenLinearVectorPallas(d_v, d_f, k_params)

    # Small batch: single block, full-dim exemption path.
    v = jax.random.normal(k_v, (2, 3, d_v), dtype=jnp.float32)
    out = jax.block_until_ready(module(v))
    ref = v.reshape(2, -1) @ module.w + module.b
    assert out.shape == (2, d_f), out.shape
    assert out.dtype == v.dtype
    assert jnp.allclose(out, ref, atol=1e-5, rtol=1e-5)

    # Slightly larger batch: multi-block grid with a ragged final block.
    v2 = jax.random.normal(k_v2, (20, 3, d_v), dtype=jnp.float32)
    out2 = jax.block_until_ready(module(v2))
    ref2 = v2.reshape(20, -1) @ module.w + module.b
    assert out2.shape == (20, d_f), out2.shape
    assert jnp.allclose(out2, ref2, atol=1e-5, rtol=1e-5)

    print("KERNEL_OK")
</pallas_src>

<mosaic_0001>
module attributes {stable_mosaic.version = 11 : i64} {
  func.func @_flatten_linear_kernel(%arg0: i32, %arg1: memref<2x96xf32, #tpu.memory_space<vmem>>, %arg2: memref<96x16xf32, #tpu.memory_space<vmem>>, %arg3: memref<1x16xf32, #tpu.memory_space<vmem>>, %arg4: memref<2x16xf32, #tpu.memory_space<vmem>>) attributes {dimension_semantics = [#tpu.dimension_semantics<parallel>], iteration_bounds = array<i64: 1>, scalar_prefetch = 0 : i64, scratch_operands = 0 : i64, tpu.core_type = #tpu.core_type<tc>, window_params = [{transform_indices = @transform_0, window_bounds = array<i64: 2, 96>}, {pipeline_mode = #tpu.pipeline_mode<synchronous>, transform_indices = @transform_1, window_bounds = array<i64: 96, 16>}, {pipeline_mode = #tpu.pipeline_mode<synchronous>, transform_indices = @transform_2, window_bounds = array<i64: 1, 16>}, {transform_indices = @transform_3, window_bounds = array<i64: 2, 16>}]} {
    %c0 = arith.constant 0 : index
    %c0_0 = arith.constant 0 : index
    %0 = vector.load %arg1[%c0, %c0_0] : memref<2x96xf32, #tpu.memory_space<vmem>>, vector<2x96xf32>
    %c0_1 = arith.constant 0 : index
    %c0_2 = arith.constant 0 : index
    %1 = vector.load %arg2[%c0_1, %c0_2] : memref<96x16xf32, #tpu.memory_space<vmem>>, vector<96x16xf32>
    %cst = arith.constant dense<0.000000e+00> : vector<2x16xf32>
    %2 = tpu.matmul %0, %1, %cst {dimension_numbers = #tpu.dot_dimension_numbers<[1], [0], [0], [1], [0, 0, 1, 1], [], []>} : vector<2x96xf32>, vector<96x16xf32>, vector<2x16xf32> -> vector<2x16xf32>
    %c0_3 = arith.constant 0 : index
    %c0_4 = arith.constant 0 : index
    %3 = vector.load %arg3[%c0_3, %c0_4] : memref<1x16xf32, #tpu.memory_space<vmem>>, vector<1x16xf32>
    %4 = vector.broadcast %3 : vector<1x16xf32> to vector<2x16xf32>
    %5 = arith.addf %2, %4 : vector<2x16xf32>
    %c0_5 = arith.constant 0 : index
    %c0_6 = arith.constant 0 : index
    %6 = vector.load %arg4[%c0_5, %c0_6] : memref<2x16xf32, #tpu.memory_space<vmem>>, vector<2x16xf32>
    tpu.vector_store %arg4[%c0_5, %c0_6], %5 {strides = array<i32>} : memref<2x16xf32, #tpu.memory_space<vmem>>, vector<2x16xf32>,
    return
  }
  func.func @transform_0(%arg0: i32) -> (i32, i32) {
    %c0_i32 = arith.constant 0 : i32
    %c0_i32_0 = arith.constant 0 : i32
    return %arg0, %c0_i32 : i32, i32
  }
  func.func @transform_1(%arg0: i32) -> (i32, i32) {
    %c0_i32 = arith.constant 0 : i32
    %c0_i32_0 = arith.constant 0 : i32
    %c0_i32_1 = arith.constant 0 : i32
    return %c0_i32, %c0_i32_0 : i32, i32
  }
  func.func @transform_2(%arg0: i32) -> (i32, i32) {
    %c0_i32 = arith.constant 0 : i32
    %c0_i32_0 = arith.constant 0 : i32
    %c0_i32_1 = arith.constant 0 : i32
    return %c0_i32, %c0_i32_0 : i32, i32
  }
  func.func @transform_3(%arg0: i32) -> (i32, i32) {
    %c0_i32 = arith.constant 0 : i32
    %c0_i32_0 = arith.constant 0 : i32
    return %arg0, %c0_i32 : i32, i32
  }
}

</mosaic_0001>

<llo_original>
// kernel: flatten_linear_vector.1
$region0: #{flatten_linear_vector.1}
  #allocation0 [shape = 'u32[]', space=smem, size = 0x4, offset = 0x4, fixed_abs, tag = 'smem constant byte address 0x4 - core index']
  #allocation1 [shape = 'u32[144,128]{1,0:T(1,128)}', space=vmem, size = 0x12000, scoped, tag = 'internal scratch']
  %s0 = inlined_call_operand.vmem [shape: f32[2,96], index: 0, kind: input, shape index: {}]
  %s1 = inlined_call_operand.vmem [shape: f32[96,16], index: 1, kind: input, shape index: {}]
  %s2 = inlined_call_operand.vmem [shape: f32[1,16], index: 2, kind: input, shape index: {}]
  %s3 = inlined_call_operand.hbm [shape: f32[2,16], index: 3, kind: output, shape index: {}]
  %s4 = sld [smem:[#allocation0]]
  $region22: #{flatten_linear_vector.1} parent=0
    _
  %s6 = ssub.s32 1, %s4
  %s7 = scalar_select 0, %s6, %s4
  $region1: #{flatten_linear_vector.1} parent=0
    #allocation2 [shape = 'u8[1024]{0}', space=vmem, size = 0x400, scoped, tag = 'output window, operand 0, single buffered']
    #allocation3 [shape = 's32[1]{0}', space=sflag, size = 0x4, scoped, tag = 'scoped memory for flatten_linear_vector.1']
    %8 = vsyncpa [#allocation3], 0
    // Predicated region
    $region2: #{flatten_linear_vector.1} parent=1 // pred_check
      _
    $region3: #{flatten_linear_vector.1} parent=1 // pred_check_branch
      %10 = sbr.rel (0) target = $region5
    $region4: #{flatten_linear_vector.1} parent=1 // pred_region
      _
    $region5: #{flatten_linear_vector.1} parent=1 // pred_fallthru
      _
    // Predicated region
    $region6: #{flatten_linear_vector.1} parent=1 // pred_check
      _
    $region7: #{flatten_linear_vector.1} parent=1 // pred_check_branch
      %12 = sbr.rel (0) target = $region9
    $region8: #{flatten_linear_vector.1} parent=1 // pred_region
      _
    $region9: #{flatten_linear_vector.1} parent=1 // pred_fallthru
      _
    // Predicated region
    $region10: #{flatten_linear_vector.1} parent=1 // pred_check
      _
    $region11: #{flatten_linear_vector.1} parent=1 // pred_check_branch
      %14 = sbr.rel (0) target = $region13
    $region12: #{flatten_linear_vector.1} parent=1 // pred_region
      _
    $region13: #{flatten_linear_vector.1} parent=1 // pred_fallthru
      _
    %v15 = vld [vmem:[%s0] sm:$0x3]
    %v16 = vld [vmem:[%s1] sm:$0xff]
    %v17 = vld [vmem:[%s1 + $0x8] sm:$0xff]
    %v18 = vld [vmem:[%s1 + $0x10] sm:$0xff]
    %v19 = vld [vmem:[%s1 + $0x18] sm:$0xff]
    %v20 = vld [vmem:[%s1 + $0x20] sm:$0xff]
    %v21 = vld [vmem:[%s1 + $0x28] sm:$0xff]
    %v22 = vld [vmem:[%s1 + $0x30] sm:$0xff]
    %v23 = vld [vmem:[%s1 + $0x38] sm:$0xff]
    %v24 = vld [vmem:[%s1 + $0x40] sm:$0xff]
    %v25 = vld [vmem:[%s1 + $0x48] sm:$0xff]
    %v26 = vld [vmem:[%s1 + $0x50] sm:$0xff]
    %v27 = vld [vmem:[%s1 + $0x58] sm:$0xff]
    %v28 = vld [vmem:[%s2] sm:$0x1]
    %v30 = vlaneseq
    %v31 = vshrl.u32 %v30, 7
    %v32 = vsub.s32 0, %v31
    %v33 = vrot.slane %v28, %v32
    %vm35 = vcmask 785408
    %v37 = vsel %vm35, %v15, 0
    %39 = vmatprep.subr.mxu0 0.0
    %40 = vmatpush1.msra.mxu0 %v16
    %41 = vmatprep.subr.mxu0 0.0
    %42 = vmatpush1.msra.mxu0 %v17
    %43 = vmatprep.subr.mxu0 0.0
    %44 = vmatpush1.msra.mxu0 %v18
    %45 = vmatprep.subr.mxu0 0.0
    %46 = vmatpush1.msra.mxu0 %v19
    %47 = vmatprep.subr.mxu0 0.0
    %48 = vmatpush1.msra.mxu0 %v20
    %49 = vmatprep.subr.mxu0 0.0
    %50 = vmatpush1.msra.mxu0 %v21
    %51 = vmatprep.subr.mxu0 0.0
    %52 = vmatpush1.msra.mxu0 %v22
    %53 = vmatprep.subr.mxu0 0.0
    %54 = vmatpush1.msra.mxu0 %v23
    %55 = vmatprep.subr.mxu0 0.0
    %56 = vmatpush1.msra.mxu0 %v24
    %57 = vmatprep.subr.mxu0 0.0
    %58 = vmatpush1.msra.mxu0 %v25
    %59 = vmatprep.subr.mxu0 0.0
    %60 = vmatpush1.msra.mxu0 %v26
    %61 = vmatprep.subr.mxu0 0.0
    %62 = vmatpush1.msra.mxu0 %v27
    %63 = vmatprep.subr.mxu0 0.0
    %64 = vmatpush1.msra.mxu0 0.0
    %65 = vmatprep.subr.mxu0 0.0
    %66 = vmatpush1.msra.mxu0 0.0
    %67 = vmatprep.subr.mxu0 0.0
    %68 = vmatpush1.msra.mxu0 0.0
    %69 = vmatprep.subr.mxu0 0.0
    %70 = vmatpush1.msra.mxu0 0.0
    %71 = vmatprep.subr.mxu0 0.0
    %72 = vmatpush1.msra.mxu0 0.0
    %73 = vmatprep.subr.mxu0 0.0
    %74 = vmatpush1.msra.mxu0 0.0
    %75 = vmatprep.subr.mxu0 0.0
    %76 = vmatpush1.msra.mxu0 0.0
    %77 = vmatprep.subr.mxu0 0.0
    %78 = vmatpush1.msra.mxu0 0.0
    %79 = vmatprep.subr.mxu0 0.0
    %80 = vmatpush1.msra.mxu0 0.0
    %81 = vmatprep.subr.mxu0 0.0
    %82 = vmatpush1.msra.mxu0 0.0
    %83 = vmatprep.subr.mxu0 0.0
    %84 = vmatpush1.msra.mxu0 0.0
    %85 = vmatprep.subr.mxu0 0.0
    %86 = vmatpush1.msra.mxu0 0.0
    %87 = vmatprep.subr.mxu0 0.0
    %88 = vmatpush1.msra.mxu0 0.0
    %89 = vmatprep.subr.mxu0 0.0
    %90 = vmatpush1.msra.mxu0 0.0
    %91 = vmatprep.subr.mxu0 0.0
    %92 = vmatpush1.msra.mxu0 0.0
    %93 = vmatprep.subr.mxu0 0.0
    %94 = vmatpush1.msra.mxu0 0.0
    %95 = vmatprep.subr.mxu0 0.0
    %96 = vmatpush1.msra.mxu0 0.0
    %97 = vmatprep.subr.mxu0 0.0
    %98 = vmatpush1.msra.mxu0 0.0
    %99 = vmatprep.subr.mxu0 0.0
    %100 = vmatpush1.msra.mxu0 0.0
    %101 = vmatprep.subr.mxu0 0.0
    %102 = vmatpush1.msra.mxu0 0.0
    %103 = vmatprep.mubr.f32.mxu0 0.0
    %104 = vmatmul.mubr.f32.gmra.mrb[0].mxu0 %v37
    %v105 = vpop.f32.mrb[0].mxu0
    %v106 = vadd.f32 %v33, %v105
    %v107 = vpop.f32.mrb[0].mxu0
    %108 = vdwg.mxu0
    %vm109 = vcmask 123904
    %110 = vst.msk [vmem:[#allocation2] sm:$0x3] %vm109, %v106
    // Predicated region
    $region14: #{flatten_linear_vector.1} parent=1 // pred_check
      _
    $region15: #{flatten_linear_vector.1} parent=1 // pred_check_branch
      %112 = sbr.rel (0) target = $region17
    $region16: #{flatten_linear_vector.1} parent=1 // pred_region
      %s114 = ssub.s32 32, 32
      %115 = vsyncadd [#allocation3], %s114
      %s117 = sshll.u32 [#allocation2], 4
      %s118 = int_to_ptr.vmem [resolvable:$true] %s117
      %120 = dma.vmem_to_hbm [thread:$0]  %s118, 32, %s3, [#allocation3]
    $region17: #{flatten_linear_vector.1} parent=1 // pred_fallthru
      _
    // Predicated region
    $region18: #{flatten_linear_vector.1} parent=1 // pred_check
      _
    $region19: #{flatten_linear_vector.1} parent=1 // pred_check_branch
      %122 = sbr.rel (0) target = $region21
    $region20: #{flatten_linear_vector.1} parent=1 // pred_region
      %123 = dma.done [#allocation3], 32
    $region21: #{flatten_linear_vector.1} parent=1 // pred_fallthru
      _
    %124 = vsyncpa [#allocation3], 1

</llo_original>
